<compile_context>
chip_gen: v6e
topology: v6e:2x2x1
jax: 0.10.0
libtpu: 0.0.40
codegen_flags: <defaults>
</compile_context>

<pallas_src>
import functools
import math

import jax
import jax.numpy as jnp
from jax.experimental import pallas as pl
from jax.experimental.pallas import tpu as pltpu

D_IN = 512     # fc1 input size (embedding width)
D_HID = 128    # fc1 output size
LANE = 128
SUBLANE = 8
NEG_BIG = -1e30  # pad value for fc2 bias columns (exp() -> 0 in softmax)


def _round_up(x, m):
    return (x + m - 1) // m * m


# ---------------------------------------------------------------------------
# Fused kernel: fc1 -> leaky_relu(0.2) -> fc2 -> (optional) softmax
# ---------------------------------------------------------------------------
def _reward_predictor_kernel(emb_ref, w1_ref, b1_ref, w2_ref, b2_ref, out_ref,
                             *, apply_softmax):
    # fc1 + leaky_relu(negative_slope=0.2); fc1_bn is identity in the module.
    h = (jnp.dot(emb_ref[...], w1_ref[...], preferred_element_type=jnp.float32)
         + b1_ref[...])                                  # [TB, 128]
    h = jnp.where(h > 0.0, h, 0.2 * h)

    # TODO(synk): add_white_noise(std=0.005) and F.dropout(p=0.1) are training-only
    # stochastic ops; eval-mode (training=False) forward makes them identity, which
    # is what this kernel implements.

    # fc2 (+ bias; padded bias columns are -1e30 so softmax over pads is exact)
    y = (jnp.dot(h, w2_ref[...], preferred_element_type=jnp.float32)
         + b2_ref[...])                                  # [TB, NBp]

    if apply_softmax:
        m = jnp.max(y, axis=-1, keepdims=True)
        e = jnp.exp(y - m)
        y = e / jnp.sum(e, axis=-1, keepdims=True)

    out_ref[...] = y


# ---------------------------------------------------------------------------
# Wrapper
# ---------------------------------------------------------------------------
@functools.partial(jax.jit, static_argnames=("softmax",))
def direct_reward_predictor_forward(emb, params, softmax=False):
    B = emb.shape[0]
    nb_bins = params["w_fc2_T"].shape[1]

    # Pad batch to a sublane multiple; pad bins to a lane multiple (lane-dense stores).
    if B <= 1024:
        Bp = _round_up(B, SUBLANE)
        TB = Bp
    else:
        TB = 1024
        Bp = _round_up(B, TB)
    NBp = _round_up(nb_bins, LANE)

    emb_p = jnp.pad(emb, ((0, Bp - B), (0, 0)))
    w2_p = jnp.pad(params["w_fc2_T"], ((0, 0), (0, NBp - nb_bins)))
    b2_p = jnp.pad(params["b_fc2"], ((0, 0), (0, NBp - nb_bins)),
                   constant_values=NEG_BIG)

    out = pl.pallas_call(
        functools.partial(_reward_predictor_kernel, apply_softmax=softmax),
        out_shape=jax.ShapeDtypeStruct((Bp, NBp), jnp.float32),
        grid_spec=pltpu.PrefetchScalarGridSpec(
            num_scalar_prefetch=0,
            grid=(Bp // TB,),
            in_specs=[
                pl.BlockSpec((TB, D_IN), lambda i: (i, 0)),     # embeddings tile
                pl.BlockSpec((D_IN, D_HID), lambda i: (0, 0)),  # W_fc1^T (resident)
                pl.BlockSpec((1, D_HID), lambda i: (0, 0)),     # b_fc1
                pl.BlockSpec((D_HID, NBp), lambda i: (0, 0)),   # W_fc2^T (padded)
                pl.BlockSpec((1, NBp), lambda i: (0, 0)),       # b_fc2 (padded)
            ],
            out_specs=pl.BlockSpec((TB, NBp), lambda i: (i, 0)),
        ),
        compiler_params=pltpu.CompilerParams(
            dimension_semantics=("parallel",),
            vmem_limit_bytes=32 << 20,
        ),
    )(emb_p, params["w_fc1_T"], params["b_fc1"], w2_p, b2_p)

    return out[:B, :nb_bins]


# ---------------------------------------------------------------------------
# Pure-JAX reference (for correctness check)
# ---------------------------------------------------------------------------
def reference_forward(emb, params, softmax=False):
    hp = functools.partial(jnp.dot, precision=jax.lax.Precision.HIGHEST)
    h = hp(emb, params["w_fc1_T"]) + params["b_fc1"]
    h = jnp.where(h > 0.0, h, 0.2 * h)
    y = hp(h, params["w_fc2_T"]) + params["b_fc2"]
    if softmax:
        y = jax.nn.softmax(y, axis=-1)
    return y


# ---------------------------------------------------------------------------
# Deterministic parameter construction (matches shapes / init style of __init__)
# ---------------------------------------------------------------------------
def make_params(key, nb_bins):
    ks = jax.random.split(key, 4)
    b1 = 1.0 / math.sqrt(D_IN)
    b2 = 1.0 / math.sqrt(D_HID)
    return {
        # fc1: Linear(512 -> 128); init_weights -> weight ~ normal(0, 0.02)
        "w_fc1_T": 0.02 * jax.random.normal(ks[0], (D_IN, D_HID), jnp.float32),
        "b_fc1": jax.random.uniform(ks[1], (1, D_HID), jnp.float32, -b1, b1),
        # fc2: Linear(128 -> nb_bins); init_weights -> weight ~ normal(0, 0.02)
        "w_fc2_T": 0.02 * jax.random.normal(ks[2], (D_HID, nb_bins), jnp.float32),
        "b_fc2": jax.random.uniform(ks[3], (1, nb_bins), jnp.float32, -b2, b2),
    }


if __name__ == "__main__":
    key = jax.random.PRNGKey(0)
    kp, ke = jax.random.split(key)

    B, NB_BINS = 8, 21
    params = make_params(kp, NB_BINS)
    emb = jax.random.normal(ke, (B, D_IN), jnp.float32)   # embeddings

    logits = direct_reward_predictor_forward(emb, params, softmax=False)
    probs = direct_reward_predictor_forward(emb, params, softmax=True)
    jax.block_until_ready((logits, probs))

    ref_logits = reference_forward(emb, params, softmax=False)
    ref_probs = reference_forward(emb, params, softmax=True)

    assert logits.shape == (B, NB_BINS) and probs.shape == (B, NB_BINS)
    assert jnp.allclose(logits, ref_logits, atol=2e-3, rtol=2e-3)
    assert jnp.allclose(probs, ref_probs, atol=2e-3, rtol=2e-3)
    assert jnp.allclose(jnp.sum(probs, axis=-1), 1.0, atol=1e-4)

    print("KERNEL_OK")
</pallas_src>

<mosaic_0001>
module attributes {stable_mosaic.version = 11 : i64} {
  func.func @_reward_predictor_kernel(%arg0: i32, %arg1: memref<8x512xf32, #tpu.memory_space<vmem>>, %arg2: memref<512x128xf32, #tpu.memory_space<vmem>>, %arg3: memref<1x128xf32, #tpu.memory_space<vmem>>, %arg4: memref<128x128xf32, #tpu.memory_space<vmem>>, %arg5: memref<1x128xf32, #tpu.memory_space<vmem>>, %arg6: memref<8x128xf32, #tpu.memory_space<vmem>>) attributes {dimension_semantics = [#tpu.dimension_semantics<parallel>], iteration_bounds = array<i64: 1>, scalar_prefetch = 0 : i64, scratch_operands = 0 : i64, tpu.core_type = #tpu.core_type<tc>, window_params = [{transform_indices = @transform_0, window_bounds = array<i64: 8, 512>}, {pipeline_mode = #tpu.pipeline_mode<synchronous>, transform_indices = @transform_1, window_bounds = array<i64: 512, 128>}, {pipeline_mode = #tpu.pipeline_mode<synchronous>, transform_indices = @transform_2, window_bounds = array<i64: 1, 128>}, {pipeline_mode = #tpu.pipeline_mode<synchronous>, transform_indices = @transform_3, window_bounds = array<i64: 128, 128>}, {pipeline_mode = #tpu.pipeline_mode<synchronous>, transform_indices = @transform_4, window_bounds = array<i64: 1, 128>}, {transform_indices = @transform_5, window_bounds = array<i64: 8, 128>}]} {
    %c0 = arith.constant 0 : index
    %c0_0 = arith.constant 0 : index
    %0 = vector.load %arg1[%c0, %c0_0] : memref<8x512xf32, #tpu.memory_space<vmem>>, vector<8x512xf32>
    %c0_1 = arith.constant 0 : index
    %c0_2 = arith.constant 0 : index
    %1 = vector.load %arg2[%c0_1, %c0_2] : memref<512x128xf32, #tpu.memory_space<vmem>>, vector<512x128xf32>
    %cst = arith.constant dense<0.000000e+00> : vector<8x128xf32>
    %2 = tpu.matmul %0, %1, %cst {dimension_numbers = #tpu.dot_dimension_numbers<[1], [0], [0], [1], [0, 0, 1, 1], [], []>} : vector<8x512xf32>, vector<512x128xf32>, vector<8x128xf32> -> vector<8x128xf32>
    %c0_3 = arith.constant 0 : index
    %c0_4 = arith.constant 0 : index
    %3 = vector.load %arg3[%c0_3, %c0_4] : memref<1x128xf32, #tpu.memory_space<vmem>>, vector<1x128xf32>
    %4 = vector.broadcast %3 : vector<1x128xf32> to vector<8x128xf32>
    %5 = arith.addf %2, %4 : vector<8x128xf32>
    %cst_5 = arith.constant 0.000000e+00 : f32
    %6 = vector.broadcast %cst_5 : f32 to vector<8x128xf32>
    %7 = arith.cmpf ogt, %5, %6 : vector<8x128xf32>
    %cst_6 = arith.constant 2.000000e-01 : f32
    %8 = vector.broadcast %cst_6 : f32 to vector<8x128xf32>
    %9 = arith.mulf %8, %5 : vector<8x128xf32>
    %10 = arith.select %7, %5, %9 : vector<8x128xi1>, vector<8x128xf32>
    %c0_7 = arith.constant 0 : index
    %c0_8 = arith.constant 0 : index
    %11 = vector.load %arg4[%c0_7, %c0_8] : memref<128x128xf32, #tpu.memory_space<vmem>>, vector<128x128xf32>
    %cst_9 = arith.constant dense<0.000000e+00> : vector<8x128xf32>
    %12 = tpu.matmul %10, %11, %cst_9 {dimension_numbers = #tpu.dot_dimension_numbers<[1], [0], [0], [1], [0, 0, 1, 1], [], []>} : vector<8x128xf32>, vector<128x128xf32>, vector<8x128xf32> -> vector<8x128xf32>
    %c0_10 = arith.constant 0 : index
    %c0_11 = arith.constant 0 : index
    %13 = vector.load %arg5[%c0_10, %c0_11] : memref<1x128xf32, #tpu.memory_space<vmem>>, vector<1x128xf32>
    %14 = vector.broadcast %13 : vector<1x128xf32> to vector<8x128xf32>
    %15 = arith.addf %12, %14 : vector<8x128xf32>
    %c0_12 = arith.constant 0 : index
    %c0_13 = arith.constant 0 : index
    %16 = vector.load %arg6[%c0_12, %c0_13] : memref<8x128xf32, #tpu.memory_space<vmem>>, vector<8x128xf32>
    tpu.vector_store %arg6[%c0_12, %c0_13], %15 {strides = array<i32>} : memref<8x128xf32, #tpu.memory_space<vmem>>, vector<8x128xf32>,
    return
  }
  func.func @transform_0(%arg0: i32) -> (i32, i32) {
    %c0_i32 = arith.constant 0 : i32
    %c0_i32_0 = arith.constant 0 : i32
    return %arg0, %c0_i32 : i32, i32
  }
  func.func @transform_1(%arg0: i32) -> (i32, i32) {
    %c0_i32 = arith.constant 0 : i32
    %c0_i32_0 = arith.constant 0 : i32
    %c0_i32_1 = arith.constant 0 : i32
    return %c0_i32, %c0_i32_0 : i32, i32
  }
  func.func @transform_2(%arg0: i32) -> (i32, i32) {
    %c0_i32 = arith.constant 0 : i32
    %c0_i32_0 = arith.constant 0 : i32
    %c0_i32_1 = arith.constant 0 : i32
    return %c0_i32, %c0_i32_0 : i32, i32
  }
  func.func @transform_3(%arg0: i32) -> (i32, i32) {
    %c0_i32 = arith.constant 0 : i32
    %c0_i32_0 = arith.constant 0 : i32
    %c0_i32_1 = arith.constant 0 : i32
    return %c0_i32, %c0_i32_0 : i32, i32
  }
  func.func @transform_4(%arg0: i32) -> (i32, i32) {
    %c0_i32 = arith.constant 0 : i32
    %c0_i32_0 = arith.constant 0 : i32
    %c0_i32_1 = arith.constant 0 : i32
    return %c0_i32, %c0_i32_0 : i32, i32
  }
  func.func @transform_5(%arg0: i32) -> (i32, i32) {
    %c0_i32 = arith.constant 0 : i32
    %c0_i32_0 = arith.constant 0 : i32
    return %arg0, %c0_i32 : i32, i32
  }
}

</mosaic_0001>

<llo_original>
// kernel: direct_reward_predictor_forward.1
$region0: #{direct_reward_predictor_forward.1}
  #allocation0 [shape = 'u32[]', space=smem, size = 0x4, offset = 0x4, fixed_abs, tag = 'smem constant byte address 0x4 - core index']
  #allocation1 [shape = 'u32[144,128]{1,0:T(1,128)}', space=vmem, size = 0x12000, scoped, tag = 'internal scratch']
  %s0 = inlined_call_operand.vmem [shape: f32[8,512], index: 0, kind: input, shape index: {}]
  %s1 = inlined_call_operand.hbm [shape: f32[512,128], index: 1, kind: input, shape index: {}]
  %s2 = inlined_call_operand.vmem [shape: f32[1,128], index: 2, kind: input, shape index: {}]
  %s3 = inlined_call_operand.vmem [shape: f32[128,128], index: 3, kind: input, shape index: {}]
  %s4 = inlined_call_operand.vmem [shape: f32[1,128], index: 4, kind: input, shape index: {}]
  %s5 = inlined_call_operand.hbm [shape: f32[8,128], index: 5, kind: output, shape index: {}]
  %s6 = sld [smem:[#allocation0]]
  $region34: #{direct_reward_predictor_forward.1} parent=0
    _
  %s8 = ssub.s32 1, %s6
  %s9 = scalar_select 0, %s8, %s6
  $region1: #{direct_reward_predictor_forward.1} parent=0
    #allocation2 [shape = 'u8[262144]{0}', space=vmem, size = 0x40000, scoped, tag = 'input window, operand 1, single buffered']
    #allocation3 [shape = 's32[1]{0}', space=sflag, size = 0x4, scoped, tag = 'scoped memory for direct_reward_predictor_forward.1']
    #allocation4 [shape = 's32[1]{0}', space=sflag, size = 0x4, scoped, tag = 'scoped memory for direct_reward_predictor_forward.1']
    #allocation5 [shape = 'u8[4096]{0}', space=vmem, size = 0x1000, scoped, tag = 'output window, operand 0, single buffered']
    %10 = vsyncpa [#allocation3], 0
    %11 = vsyncpa [#allocation4], 0
    // Predicated region
    $region2: #{direct_reward_predictor_forward.1} parent=1 // pred_check
      _
    $region3: #{direct_reward_predictor_forward.1} parent=1 // pred_check_branch
      %13 = sbr.rel (0) target = $region5
    $region4: #{direct_reward_predictor_forward.1} parent=1 // pred_region
      _
    $region5: #{direct_reward_predictor_forward.1} parent=1 // pred_fallthru
      _
    // Predicated region
    $region6: #{direct_reward_predictor_forward.1} parent=1 // pred_check
      _
    $region7: #{direct_reward_predictor_forward.1} parent=1 // pred_check_branch
      %15 = sbr.rel (0) target = $region9
    $region8: #{direct_reward_predictor_forward.1} parent=1 // pred_region
      %s17 = ssub.s32 8192, 8192
      %18 = vsyncadd [#allocation3], %s17
      %s19 = sshll.u32 [#allocation2], 4
      %s20 = int_to_ptr.vmem [resolvable:$true] %s19
      %25 = dma.hbm_to_vmem [thread:$0]  %s1, 8192, %s20, [#allocation3], 128, 128, 8
    $region9: #{direct_reward_predictor_forward.1} parent=1 // pred_fallthru
      _
    // Predicated region
    $region10: #{direct_reward_predictor_forward.1} parent=1 // pred_check
      _
    $region11: #{direct_reward_predictor_forward.1} parent=1 // pred_check_branch
      %27 = sbr.rel (0) target = $region13
    $region12: #{direct_reward_predictor_forward.1} parent=1 // pred_region
      _
    $region13: #{direct_reward_predictor_forward.1} parent=1 // pred_fallthru
      _
    // Predicated region
    $region14: #{direct_reward_predictor_forward.1} parent=1 // pred_check
      _
    $region15: #{direct_reward_predictor_forward.1} parent=1 // pred_check_branch
      %29 = sbr.rel (0) target = $region17
    $region16: #{direct_reward_predictor_forward.1} parent=1 // pred_region
      _
    $region17: #{direct_reward_predictor_forward.1} parent=1 // pred_fallthru
      _
    // Predicated region
    $region18: #{direct_reward_predictor_forward.1} parent=1 // pred_check
      _
    $region19: #{direct_reward_predictor_forward.1} parent=1 // pred_check_branch
      %31 = sbr.rel (0) target = $region21
    $region20: #{direct_reward_predictor_forward.1} parent=1 // pred_region
      _
    $region21: #{direct_reward_predictor_forward.1} parent=1 // pred_fallthru
      _
    // Predicated region
    $region22: #{direct_reward_predictor_forward.1} parent=1 // pred_check
      _
    $region23: #{direct_reward_predictor_forward.1} parent=1 // pred_check_branch
      %33 = sbr.rel (0) target = $region25
    $region24: #{direct_reward_predictor_forward.1} parent=1 // pred_region
      %34 = dma.done [#allocation3], 8192
    $region25: #{direct_reward_predictor_forward.1} parent=1 // pred_fallthru
      _
    %v35 = vld [vmem:[%s0] sm:$0xff]
    %v36 = vld [vmem:[%s0 + $0x8] sm:$0xff]
    %v37 = vld [vmem:[%s0 + $0x10] sm:$0xff]
    %v38 = vld [vmem:[%s0 + $0x18] sm:$0xff]
    %v39 = vld [vmem:[#allocation2] sm:$0xff]
    %v40 = vld [vmem:[#allocation2 + $0x8] sm:$0xff]
    %v41 = vld [vmem:[#allocation2 + $0x10] sm:$0xff]
    %v42 = vld [vmem:[#allocation2 + $0x18] sm:$0xff]
    %v43 = vld [vmem:[#allocation2 + $0x20] sm:$0xff]
    %v44 = vld [vmem:[#allocation2 + $0x28] sm:$0xff]
    %v45 = vld [vmem:[#allocation2 + $0x30] sm:$0xff]
    %v46 = vld [vmem:[#allocation2 + $0x38] sm:$0xff]
    %v47 = vld [vmem:[#allocation2 + $0x40] sm:$0xff]
    %v48 = vld [vmem:[#allocation2 + $0x48] sm:$0xff]
    %v49 = vld [vmem:[#allocation2 + $0x50] sm:$0xff]
    %v50 = vld [vmem:[#allocation2 + $0x58] sm:$0xff]
    %v51 = vld [vmem:[#allocation2 + $0x60] sm:$0xff]
    %v52 = vld [vmem:[#allocation2 + $0x68] sm:$0xff]
    %v53 = vld [vmem:[#allocation2 + $0x70] sm:$0xff]
    %v54 = vld [vmem:[#allocation2 + $0x78] sm:$0xff]
    %v55 = vld [vmem:[#allocation2 + $0x80] sm:$0xff]
    %v56 = vld [vmem:[#allocation2 + $0x88] sm:$0xff]
    %v57 = vld [vmem:[#allocation2 + $0x90] sm:$0xff]
    %v58 = vld [vmem:[#allocation2 + $0x98] sm:$0xff]
    %v59 = vld [vmem:[#allocation2 + $0xa0] sm:$0xff]
    %v60 = vld [vmem:[#allocation2 + $0xa8] sm:$0xff]
    %v61 = vld [vmem:[#allocation2 + $0xb0] sm:$0xff]
    %v62 = vld [vmem:[#allocation2 + $0xb8] sm:$0xff]
    %v63 = vld [vmem:[#allocation2 + $0xc0] sm:$0xff]
    %v64 = vld [vmem:[#allocation2 + $0xc8] sm:$0xff]
    %v65 = vld [vmem:[#allocation2 + $0xd0] sm:$0xff]
    %v66 = vld [vmem:[#allocation2 + $0xd8] sm:$0xff]
    %v67 = vld [vmem:[#allocation2 + $0xe0] sm:$0xff]
    %v68 = vld [vmem:[#allocation2 + $0xe8] sm:$0xff]
    %v69 = vld [vmem:[#allocation2 + $0xf0] sm:$0xff]
    %v70 = vld [vmem:[#allocation2 + $0xf8] sm:$0xff]
    %v71 = vld [vmem:[#allocation2 + $0x100] sm:$0xff]
    %v72 = vld [vmem:[#allocation2 + $0x108] sm:$0xff]
    %v73 = vld [vmem:[#allocation2 + $0x110] sm:$0xff]
    %v74 = vld [vmem:[#allocation2 + $0x118] sm:$0xff]
    %v75 = vld [vmem:[#allocation2 + $0x120] sm:$0xff]
    %v76 = vld [vmem:[#allocation2 + $0x128] sm:$0xff]
    %v77 = vld [vmem:[#allocation2 + $0x130] sm:$0xff]
    %v78 = vld [vmem:[#allocation2 + $0x138] sm:$0xff]
    %v79 = vld [vmem:[#allocation2 + $0x140] sm:$0xff]
    %v80 = vld [vmem:[#allocation2 + $0x148] sm:$0xff]
    %v81 = vld [vmem:[#allocation2 + $0x150] sm:$0xff]
    %v82 = vld [vmem:[#allocation2 + $0x158] sm:$0xff]
    %v83 = vld [vmem:[#allocation2 + $0x160] sm:$0xff]
    %v84 = vld [vmem:[#allocation2 + $0x168] sm:$0xff]
    %v85 = vld [vmem:[#allocation2 + $0x170] sm:$0xff]
    %v86 = vld [vmem:[#allocation2 + $0x178] sm:$0xff]
    %v87 = vld [vmem:[#allocation2 + $0x180] sm:$0xff]
    %v88 = vld [vmem:[#allocation2 + $0x188] sm:$0xff]
    %v89 = vld [vmem:[#allocation2 + $0x190] sm:$0xff]
    %v90 = vld [vmem:[#allocation2 + $0x198] sm:$0xff]
    %v91 = vld [vmem:[#allocation2 + $0x1a0] sm:$0xff]
    %v92 = vld [vmem:[#allocation2 + $0x1a8] sm:$0xff]
    %v93 = vld [vmem:[#allocation2 + $0x1b0] sm:$0xff]
    %v94 = vld [vmem:[#allocation2 + $0x1b8] sm:$0xff]
    %v95 = vld [vmem:[#allocation2 + $0x1c0] sm:$0xff]
    %v96 = vld [vmem:[#allocation2 + $0x1c8] sm:$0xff]
    %v97 = vld [vmem:[#allocation2 + $0x1d0] sm:$0xff]
    %v98 = vld [vmem:[#allocation2 + $0x1d8] sm:$0xff]
    %v99 = vld [vmem:[#allocation2 + $0x1e0] sm:$0xff]
    %v100 = vld [vmem:[#allocation2 + $0x1e8] sm:$0xff]
    %v101 = vld [vmem:[#allocation2 + $0x1f0] sm:$0xff]
    %v102 = vld [vmem:[#allocation2 + $0x1f8] sm:$0xff]
    %v103 = vld [vmem:[%s2] sm:$0x1]
    %v105 = vlaneseq
    %v106 = vshrl.u32 %v105, 7
    %v107 = vsub.s32 0, %v106
    %v108 = vrot.slane %v103, %v107
    %110 = vmatprep.subr.mxu0 0.0
    %111 = vmatpush1.msra.mxu0 %v54
    %112 = vmatprep.subr.mxu0 0.0
    %113 = vmatpush1.msra.mxu0 %v53
    %114 = vmatprep.subr.mxu0 0.0
    %115 = vmatpush1.msra.mxu0 %v52
    %116 = vmatprep.subr.mxu0 0.0
    %117 = vmatpush1.msra.mxu0 %v51
    %118 = vmatprep.subr.mxu0 0.0
    %119 = vmatpush1.msra.mxu0 %v50
    %120 = vmatprep.subr.mxu0 0.0
    %121 = vmatpush1.msra.mxu0 %v49
    %122 = vmatprep.subr.mxu0 0.0
    %123 = vmatpush1.msra.mxu0 %v48
    %124 = vmatprep.subr.mxu0 0.0
    %125 = vmatpush1.msra.mxu0 %v47
    %126 = vmatprep.subr.mxu0 0.0
    %127 = vmatpush1.msra.mxu0 %v46
    %128 = vmatprep.subr.mxu0 0.0
    %129 = vmatpush1.msra.mxu0 %v45
    %130 = vmatprep.subr.mxu0 0.0
    %131 = vmatpush1.msra.mxu0 %v44
    %132 = vmatprep.subr.mxu0 0.0
    %133 = vmatpush1.msra.mxu0 %v43
    %134 = vmatprep.subr.mxu0 0.0
    %135 = vmatpush1.msra.mxu0 %v42
    %136 = vmatprep.subr.mxu0 0.0
    %137 = vmatpush1.msra.mxu0 %v41
    %138 = vmatprep.subr.mxu0 0.0
    %139 = vmatpush1.msra.mxu0 %v40
    %140 = vmatprep.subr.mxu0 0.0
    %141 = vmatpush1.msra.mxu0 %v39
    %142 = vmatprep.subr.mxu0 0.0
    %143 = vmatpush2.msra.mxu0 %v70
    %144 = vmatprep.subr.mxu0 0.0
    %145 = vmatpush2.msra.mxu0 %v69
    %146 = vmatprep.subr.mxu0 0.0
    %147 = vmatpush2.msra.mxu0 %v68
    %148 = vmatprep.subr.mxu0 0.0
    %149 = vmatpush2.msra.mxu0 %v67
    %150 = vmatprep.subr.mxu0 0.0
    %151 = vmatpush2.msra.mxu0 %v66
    %152 = vmatprep.subr.mxu0 0.0
    %153 = vmatpush2.msra.mxu0 %v65
    %154 = vmatprep.subr.mxu0 0.0
    %155 = vmatpush2.msra.mxu0 %v64
    %156 = vmatprep.subr.mxu0 0.0
    %157 = vmatpush2.msra.mxu0 %v63
    %158 = vmatprep.subr.mxu0 0.0
    %159 = vmatpush2.msra.mxu0 %v62
    %160 = vmatprep.subr.mxu0 0.0
    %161 = vmatpush2.msra.mxu0 %v61
    %162 = vmatprep.subr.mxu0 0.0
    %163 = vmatpush2.msra.mxu0 %v60
    %164 = vmatprep.subr.mxu0 0.0
    %165 = vmatpush2.msra.mxu0 %v59
    %166 = vmatprep.subr.mxu0 0.0
    %167 = vmatpush2.msra.mxu0 %v58
    %168 = vmatprep.subr.mxu0 0.0
    %169 = vmatpush2.msra.mxu0 %v57
    %170 = vmatprep.subr.mxu0 0.0
    %171 = vmatpush2.msra.mxu0 %v56
    %172 = vmatprep.subr.mxu0 0.0
    %173 = vmatpush2.msra.mxu0 %v55
    %174 = vmatprep.mubr.f32.mxu0 %v36
    %175 = vmatmul.mubr.f32.gmra.mxu0 %v35
    %v176 = vpop.f32.mrf.mxu0
    %v177 = vadd.f32 %v108, %v176
    %v178 = vpop.f32.mrf.mxu0
    %179 = vdwg.mxu0
    %180 = vmatprep.subr.mxu0 0.0
    %181 = vmatpush1.msra.mxu0 %v86
    %182 = vmatprep.subr.mxu0 0.0
    %183 = vmatpush1.msra.mxu0 %v85
    %184 = vmatprep.subr.mxu0 0.0
    %185 = vmatpush1.msra.mxu0 %v84
    %186 = vmatprep.subr.mxu0 0.0
    %187 = vmatpush1.msra.mxu0 %v83
    %188 = vmatprep.subr.mxu0 0.0
    %189 = vmatpush1.msra.mxu0 %v82
    %190 = vmatprep.subr.mxu0 0.0
    %191 = vmatpush1.msra.mxu0 %v81
    %192 = vmatprep.subr.mxu0 0.0
    %193 = vmatpush1.msra.mxu0 %v80
    %194 = vmatprep.subr.mxu0 0.0
    %195 = vmatpush1.msra.mxu0 %v79
    %196 = vmatprep.subr.mxu0 0.0
    %197 = vmatpush1.msra.mxu0 %v78
    %198 = vmatprep.subr.mxu0 0.0
    %199 = vmatpush1.msra.mxu0 %v77
    %200 = vmatprep.subr.mxu0 0.0
    %201 = vmatpush1.msra.mxu0 %v76
    %202 = vmatprep.subr.mxu0 0.0
    %203 = vmatpush1.msra.mxu0 %v75
    %204 = vmatprep.subr.mxu0 0.0
    %205 = vmatpush1.msra.mxu0 %v74
    %206 = vmatprep.subr.mxu0 0.0
    %207 = vmatpush1.msra.mxu0 %v73
    %208 = vmatprep.subr.mxu0 0.0
    %209 = vmatpush1.msra.mxu0 %v72
    %210 = vmatprep.subr.mxu0 0.0
    %211 = vmatpush1.msra.mxu0 %v71
    %212 = vmatprep.subr.mxu0 0.0
    %213 = vmatpush2.msra.mxu0 %v102
    %214 = vmatprep.subr.mxu0 0.0
    %215 = vmatpush2.msra.mxu0 %v101
    %216 = vmatprep.subr.mxu0 0.0
    %217 = vmatpush2.msra.mxu0 %v100
    %218 = vmatprep.subr.mxu0 0.0
    %219 = vmatpush2.msra.mxu0 %v99
    %220 = vmatprep.subr.mxu0 0.0
    %221 = vmatpush2.msra.mxu0 %v98
    %222 = vmatprep.subr.mxu0 0.0
    %223 = vmatpush2.msra.mxu0 %v97
    %224 = vmatprep.subr.mxu0 0.0
    %225 = vmatpush2.msra.mxu0 %v96
    %226 = vmatprep.subr.mxu0 0.0
    %227 = vmatpush2.msra.mxu0 %v95
    %228 = vmatprep.subr.mxu0 0.0
    %229 = vmatpush2.msra.mxu0 %v94
    %230 = vmatprep.subr.mxu0 0.0
    %231 = vmatpush2.msra.mxu0 %v93
    %232 = vmatprep.subr.mxu0 0.0
    %233 = vmatpush2.msra.mxu0 %v92
    %234 = vmatprep.subr.mxu0 0.0
    %235 = vmatpush2.msra.mxu0 %v91
    %236 = vmatprep.subr.mxu0 0.0
    %237 = vmatpush2.msra.mxu0 %v90
    %238 = vmatprep.subr.mxu0 0.0
    %239 = vmatpush2.msra.mxu0 %v89
    %240 = vmatprep.subr.mxu0 0.0
    %241 = vmatpush2.msra.mxu0 %v88
    %242 = vmatprep.subr.mxu0 0.0
    %243 = vmatpush2.msra.mxu0 %v87
    %244 = vmatprep.mubr.f32.mxu0 %v38
    %245 = vmatmul.mubr.f32.gmra.mxu0 %v37
    %v246 = vpop.f32.mrf.mxu0
    %v247 = vadd.f32 %v177, %v246
    %v248 = vpop.f32.mrf.mxu0
    %249 = vdwg.mxu0
    %vm250 = vcmp.gt.f32.partialorder %v247, 0.0
    %v251 = vmul.f32 %v247, 0.2
    %v252 = vsel %vm250, %v247, %v251
    %v253 = vld [vmem:[%s3] sm:$0xff]
    %v254 = vld [vmem:[%s3 + $0x8] sm:$0xff]
    %v255 = vld [vmem:[%s3 + $0x10] sm:$0xff]
    %v256 = vld [vmem:[%s3 + $0x18] sm:$0xff]
    %v257 = vld [vmem:[%s3 + $0x20] sm:$0xff]
    %v258 = vld [vmem:[%s3 + $0x28] sm:$0xff]
    %v259 = vld [vmem:[%s3 + $0x30] sm:$0xff]
    %v260 = vld [vmem:[%s3 + $0x38] sm:$0xff]
    %v261 = vld [vmem:[%s3 + $0x40] sm:$0xff]
    %v262 = vld [vmem:[%s3 + $0x48] sm:$0xff]
    %v263 = vld [vmem:[%s3 + $0x50] sm:$0xff]
    %v264 = vld [vmem:[%s3 + $0x58] sm:$0xff]
    %v265 = vld [vmem:[%s3 + $0x60] sm:$0xff]
    %v266 = vld [vmem:[%s3 + $0x68] sm:$0xff]
    %v267 = vld [vmem:[%s3 + $0x70] sm:$0xff]
    %v268 = vld [vmem:[%s3 + $0x78] sm:$0xff]
    %v269 = vld [vmem:[%s4] sm:$0x1]
    %v271 = vlaneseq
    %v272 = vshrl.u32 %v271, 7
    %v273 = vsub.s32 0, %v272
    %v274 = vrot.slane %v269, %v273
    %276 = vmatprep.subr.mxu0 0.0
    %277 = vmatpush1.msra.mxu0 %v268
    %278 = vmatprep.subr.mxu0 0.0
    %279 = vmatpush1.msra.mxu0 %v267
    %280 = vmatprep.subr.mxu0 0.0
    %281 = vmatpush1.msra.mxu0 %v266
    %282 = vmatprep.subr.mxu0 0.0
    %283 = vmatpush1.msra.mxu0 %v265
    %284 = vmatprep.subr.mxu0 0.0
    %285 = vmatpush1.msra.mxu0 %v264
    %286 = vmatprep.subr.mxu0 0.0
    %287 = vmatpush1.msra.mxu0 %v263
    %288 = vmatprep.subr.mxu0 0.0
    %289 = vmatpush1.msra.mxu0 %v262
    %290 = vmatprep.subr.mxu0 0.0
    %291 = vmatpush1.msra.mxu0 %v261
    %292 = vmatprep.subr.mxu0 0.0
    %293 = vmatpush1.msra.mxu0 %v260
    %294 = vmatprep.subr.mxu0 0.0
    %295 = vmatpush1.msra.mxu0 %v259
    %296 = vmatprep.subr.mxu0 0.0
    %297 = vmatpush1.msra.mxu0 %v258
    %298 = vmatprep.subr.mxu0 0.0
    %299 = vmatpush1.msra.mxu0 %v257
    %300 = vmatprep.subr.mxu0 0.0
    %301 = vmatpush1.msra.mxu0 %v256
    %302 = vmatprep.subr.mxu0 0.0
    %303 = vmatpush1.msra.mxu0 %v255
    %304 = vmatprep.subr.mxu0 0.0
    %305 = vmatpush1.msra.mxu0 %v254
    %306 = vmatprep.subr.mxu0 0.0
    %307 = vmatpush1.msra.mxu0 %v253
    %308 = vmatprep.subr.mxu0 0.0
    %309 = vmatpush2.msra.mxu0 0.0
    %310 = vmatprep.subr.mxu0 0.0
    %311 = vmatpush2.msra.mxu0 0.0
    %312 = vmatprep.subr.mxu0 0.0
    %313 = vmatpush2.msra.mxu0 0.0
    %314 = vmatprep.subr.mxu0 0.0
    %315 = vmatpush2.msra.mxu0 0.0
    %316 = vmatprep.subr.mxu0 0.0
    %317 = vmatpush2.msra.mxu0 0.0
    %318 = vmatprep.subr.mxu0 0.0
    %319 = vmatpush2.msra.mxu0 0.0
    %320 = vmatprep.subr.mxu0 0.0
    %321 = vmatpush2.msra.mxu0 0.0
    %322 = vmatprep.subr.mxu0 0.0
    %323 = vmatpush2.msra.mxu0 0.0
    %324 = vmatprep.subr.mxu0 0.0
    %325 = vmatpush2.msra.mxu0 0.0
    %326 = vmatprep.subr.mxu0 0.0
    %327 = vmatpush2.msra.mxu0 0.0
    %328 = vmatprep.subr.mxu0 0.0
    %329 = vmatpush2.msra.mxu0 0.0
    %330 = vmatprep.subr.mxu0 0.0
    %331 = vmatpush2.msra.mxu0 0.0
    %332 = vmatprep.subr.mxu0 0.0
    %333 = vmatpush2.msra.mxu0 0.0
    %334 = vmatprep.subr.mxu0 0.0
    %335 = vmatpush2.msra.mxu0 0.0
    %336 = vmatprep.subr.mxu0 0.0
    %337 = vmatpush2.msra.mxu0 0.0
    %338 = vmatprep.subr.mxu0 0.0
    %339 = vmatpush2.msra.mxu0 0.0
    %340 = vmatprep.mubr.f32.mxu0 0.0
    %341 = vmatmul.mubr.f32.gmra.mxu0 %v252
    %v342 = vpop.f32.mrf.mxu0
    %v343 = vadd.f32 %v274, %v342
    %v344 = vpop.f32.mrf.mxu0
    %345 = vdwg.mxu0
    %346 = vst [vmem:[#allocation5] sm:$0xff] %v343
    // Predicated region
    $region26: #{direct_reward_predictor_forward.1} parent=1 // pred_check
      _
    $region27: #{direct_reward_predictor_forward.1} parent=1 // pred_check_branch
      %348 = sbr.rel (0) target = $region29
    $region28: #{direct_reward_predictor_forward.1} parent=1 // pred_region
      %s350 = ssub.s32 128, 128
      %351 = vsyncadd [#allocation4], %s350
      %s353 = sshll.u32 [#allocation5], 4
      %s354 = int_to_ptr.vmem [resolvable:$true] %s353
      %356 = dma.vmem_to_hbm [thread:$0]  %s354, 128, %s5, [#allocation4]
    $region29: #{direct_reward_predictor_forward.1} parent=1 // pred_fallthru
      _
    // Predicated region
    $region30: #{direct_reward_predictor_forward.1} parent=1 // pred_check
      _
    $region31: #{direct_reward_predictor_forward.1} parent=1 // pred_check_branch
      %358 = sbr.rel (0) target = $region33
    $region32: #{direct_reward_predictor_forward.1} parent=1 // pred_region
      %359 = dma.done [#allocation4], 128
    $region33: #{direct_reward_predictor_forward.1} parent=1 // pred_fallthru
      _
    %360 = vsyncpa [#allocation3], 1
    %361 = vsyncpa [#allocation4], 1

</llo_original>
